<compile_context>
chip_gen: v7x
topology: tpu7x:2x2x1
jax: 0.10.0
libtpu: 0.0.40
codegen_flags: <defaults>
</compile_context>

<pallas_src>
import functools

import jax
import jax.numpy as jnp
from jax import lax
from jax.experimental import pallas as pl
from jax.experimental.pallas import tpu as pltpu

LANE = 128


def _round_up(x, m):
    return (x + m - 1) // m * m


# ---------------------------------------------------------------------------
# pltpu.roll sign-convention probe (run once, outside jit, result cached)
# ---------------------------------------------------------------------------
@functools.lru_cache(maxsize=None)
def _roll_conventions():
    """Returns (sub_is_jnp, lane_is_jnp); True means roll(x, s, axis)[i] ==
    x[(i - s) % n] (jnp.roll semantics) for that axis."""
    def kern(r_ref, c_ref, o0_ref, o1_ref):
        o0_ref[...] = pltpu.roll(r_ref[...], 1, axis=0)
        o1_ref[...] = pltpu.roll(c_ref[...], 1, axis=1)

    r = jnp.broadcast_to(jnp.arange(8, dtype=jnp.float32)[:, None], (8, LANE))
    c = jnp.broadcast_to(jnp.arange(LANE, dtype=jnp.float32)[None, :], (8, LANE))
    o0, o1 = pl.pallas_call(
        kern,
        out_shape=(jax.ShapeDtypeStruct((8, LANE), jnp.float32),
                   jax.ShapeDtypeStruct((8, LANE), jnp.float32)),
    )(r, c)
    o0, o1 = jax.device_get((o0, o1))
    return bool(o0[1, 0] == 0.0), bool(o1[0, 1] == 0.0)


def _shift_amount(delta, size, is_jnp_convention):
    """Static non-negative roll amount so that result[i] == x[(i + delta) % size]."""
    return (size - delta) % size if is_jnp_convention else (delta % size)


# ---------------------------------------------------------------------------
# Kernel
# ---------------------------------------------------------------------------
def textcnn_kernel(e_ref, w_all_ref, b_all_ref, tmask_ref, wfc_ref, bfc_ref,
                   out_ref, *, M, taps):
    """One batch tile: fused conv matmul -> roll/add/ReLU/max-pool -> FC."""
    rows, _ = e_ref.shape
    Bt = rows // M
    N_pad = w_all_ref.shape[-1]

    # ---- one fused lane-dense MXU matmul for ALL conv taps of all branches --
    # (Bt*M, D) x (D, N_pad) -> (Bt*M, N_pad), f32 accumulation.  Each branch's
    # conv bias lives only in its tap-0 columns, so the tap sum below adds it
    # exactly once per branch.
    p = jnp.dot(e_ref[...], w_all_ref[...], preferred_element_type=jnp.float32)
    p = p + b_all_ref[...].astype(jnp.float32)

    # ---- full-vreg valid-conv tap sum (XLU rolls + VPU adds) ----------------
    # Tap dk of every branch sits dk rows later in time and dk*K lanes to the
    # right of that branch's tap-0 lanes, so one time roll + one lane roll
    # aligns all branches at once.  Taps that only exist for the longer
    # branches are gated with a full-vreg lane select.  Rows contaminated by
    # the roll wrap (t >= M - dk) are always >= each branch's t_out and get
    # masked before the pool.
    need_iota = any(lo > 0 for _, _, lo in taps)
    lane_iota = (lax.broadcasted_iota(jnp.int32, (rows, N_pad), 1)
                 if need_iota else None)
    acc = p
    for row_shift, lane_shift, lane_lo in taps:            # static unroll
        shifted = pltpu.roll(p, row_shift, axis=0) if row_shift else p
        if lane_shift:
            shifted = pltpu.roll(shifted, lane_shift, axis=1)
        if lane_lo > 0:
            shifted = jnp.where(lane_iota >= lane_lo, shifted, 0.0)
        acc = acc + shifted

    # ---- ReLU + per-sample global max-pool over time (full lane width) ------
    # Invalid rows get -1e30 before the ReLU -> 0 after it, which never wins
    # the max since valid ReLU rows are >= 0 (== F.relu + max_pool1d).
    acc3 = acc.reshape(Bt, M, N_pad)      # sublane split; a view when M % 8 == 0
    relu = jnp.maximum(acc3 + tmask_ref[...], 0.0)
    pooled = jnp.max(relu, axis=1)        # (Bt, N_pad)

    # ---- dropout = identity (eval); FC as one lane-dense MXU matmul ---------
    # wfc has zero rows at every non-tap-0 / padding lane, so garbage lanes
    # vanish; classes are zero-padded to 128 lanes -> unmasked stores.
    logits = jnp.dot(pooled.astype(wfc_ref.dtype), wfc_ref[...],
                     preferred_element_type=jnp.float32)
    out_ref[...] = (logits + bfc_ref[...].astype(jnp.float32)).astype(out_ref.dtype)


# ---------------------------------------------------------------------------
# Packing / sizing helpers
# ---------------------------------------------------------------------------
def pack_params(params, compute_dtype=jnp.bfloat16):
    """Fuse / pad the conv + FC weights into lane-dense MXU-friendly blocks."""
    K = params['w3'].shape[-1]
    D = params['w3'].shape[1]
    ksizes = (params['w3'].shape[0], params['w4'].shape[0], params['w5'].shape[0])
    # The tap gating in the kernel assumes branches sorted by ascending kernel
    # size (true for the module's (3, 4, 5)).
    assert tuple(sorted(ksizes)) == ksizes
    n_taps = sum(ksizes)
    N_pad = _round_up(n_taps * K, LANE)

    w_all = jnp.zeros((D, N_pad), jnp.float32)
    b_all = jnp.zeros((1, N_pad), jnp.float32)
    offs = []
    off = 0
    for name_w, name_b, ksz in (('w3', 'b3', ksizes[0]),
                                ('w4', 'b4', ksizes[1]),
                                ('w5', 'b5', ksizes[2])):
        offs.append(off)
        w = params[name_w]                                     # (ksz, D, K)
        for dk in range(ksz):
            w_all = w_all.at[:, off + dk * K:off + (dk + 1) * K].set(w[dk])
        b_all = b_all.at[:, off:off + K].set(params[name_b])   # tap-0 cols only
        off += ksz * K

    # FC weight spread onto the pooled 128-lane layout: real rows only at each
    # branch's tap-0 lanes; zero rows annihilate the garbage/padding lanes.
    C = params['wfc'].shape[-1]
    C_pad = _round_up(C, LANE)
    wfc_full = jnp.zeros((N_pad, C_pad), jnp.float32)
    for g, off_g in enumerate(offs):
        wfc_full = wfc_full.at[off_g:off_g + K, :C].set(
            params['wfc'][g * K:(g + 1) * K, :])
    bfc_p = jnp.zeros((1, C_pad), jnp.float32).at[:, :C].set(params['bfc'])

    return {
        'w_all': w_all.astype(compute_dtype),     # MXU inputs in bf16
        'b_all': b_all,                           # biases / masks stay f32
        'wfc': wfc_full.astype(compute_dtype),
        'bfc': bfc_p,
        'K': K, 'D': D, 'ksizes': ksizes, 'offs': tuple(offs),
        'C': C, 'C_pad': C_pad, 'N_pad': N_pad,
    }


def _make_time_mask(M, N_pad, K, ksizes, neg=-1e30):
    """(M, N_pad) additive mask: 0 where the valid-conv row exists, -1e30 else."""
    t_out = jnp.full((N_pad,), M, jnp.int32)       # padding lanes: don't care
    off = 0
    for ksz in ksizes:
        t_out = t_out.at[off:off + ksz * K].set(M - ksz + 1)
        off += ksz * K
    t = jnp.arange(M, dtype=jnp.int32)[:, None]
    return jnp.where(t < t_out[None, :], 0.0, neg).astype(jnp.float32)


def _default_vmem_limit():
    """~3/4 of physical VMEM, capped at 100 MiB: ~48 MiB on v7x (64 MiB/TC),
    ~96 MiB on v5e/v6e (128 MiB)."""
    try:
        cap = pltpu.get_tpu_info().vmem_capacity_bytes
    except Exception:
        cap = 64 * 1024 * 1024
    return int(min(cap * 3 // 4, 100 * 1024 * 1024))


def _pick_batch_tile(B, M, D, N_pad, C_pad, vmem_limit, block_b):
    """Batch tile Bt: big enough to amortize the ~0.35us/step grid overhead and
    fill the MXU (target Bt*M in the 512-2048 row range), with Bt*M a multiple
    of 16 (bf16 sublane packing), capped by the f32 (Bt*M, N_pad) intermediate
    + double-buffered input, and keeping >= 2 grid steps when the batch allows
    (v7x megacore)."""
    def align(bt):
        bt = _round_up(max(bt, 1), 8)
        if (bt * M) % 16:
            bt = _round_up(bt, 16)
        return bt

    def vmem_cost(bt):
        rows = bt * M
        return (3 * rows * N_pad * 4       # p / acc / relu f32 live ranges
                + 2 * rows * D * 2         # double-buffered bf16 emb tile
                + 2 * bt * C_pad * 4)      # double-buffered f32 out tile

    bt = align(min(block_b, max(B, 8)))
    while bt > 8 and vmem_cost(bt) > vmem_limit // 2:
        nbt = align(bt // 2)
        if nbt >= bt:
            break
        bt = nbt
    while bt > 16 and -(-B // bt) < 2:     # prefer >= 2 grid steps
        nbt = align(bt // 2)
        if nbt >= bt:
            break
        bt = nbt
    return bt


# ---------------------------------------------------------------------------
# Forward wrapper
# ---------------------------------------------------------------------------
def textcnn_forward(token_ids, params, *, block_b=64,
                    compute_dtype=jnp.bfloat16, vmem_limit_bytes=None):
    packed = pack_params(params, compute_dtype)
    K, ksizes, offs = packed['K'], packed['ksizes'], packed['offs']
    N_pad, C, C_pad = packed['N_pad'], packed['C'], packed['C_pad']

    # Embedding lookup (gather) stays in XLA; everything downstream is fused.
    # TODO(synk): fuse the gather into the kernel (scalar-prefetched token ids
    # + DMA row gather from an HBM embedding ref) to drop the extra HBM round
    # trip on the embedding activations (largest win on v5e).
    emb = jnp.take(params['embedding'], token_ids, axis=0).astype(compute_dtype)
    B, M, D = emb.shape
    assert M >= max(ksizes), "sequence length must be >= largest conv kernel"

    vmem_limit = vmem_limit_bytes or _default_vmem_limit()
    Bt = _pick_batch_tile(B, M, D, N_pad, C_pad, vmem_limit, block_b)
    B_pad = _round_up(B, Bt)
    if B_pad != B:
        emb = jnp.pad(emb, ((0, B_pad - B), (0, 0), (0, 0)))
    emb2d = emb.reshape(B_pad * M, D)          # tall, lane-dense MXU LHS
    rows = Bt * M

    # Static per-tap (time shift, lane shift, first lane needing this tap)
    # triples, using the probed pltpu.roll sign convention.
    sub_jnp, lane_jnp = _roll_conventions()
    taps = tuple(
        (_shift_amount(dk, rows, sub_jnp),
         _shift_amount(dk * K, N_pad, lane_jnp),
         next(offs[g] for g, ksz in enumerate(ksizes) if ksz > dk))
        for dk in range(1, max(ksizes)))

    tmask = _make_time_mask(M, N_pad, K, ksizes)
    grid = (B_pad // Bt,)

    def full_spec(a):
        # Weights / masks resident across the grid.  NOTE: constant-index-map
        # inputs are still double-buffered by default; they total < 200 KiB
        # here.  For realistic D/K sizes, mark them pipeline_mode=pl.Buffered(1)
        # to return that VMEM to a bigger batch tile.
        return pl.BlockSpec(a.shape, lambda b, nd=a.ndim: (0,) * nd)

    flops = 2 * B_pad * M * D * N_pad + 2 * B_pad * N_pad * C_pad
    bytes_accessed = (
        emb2d.size * emb2d.dtype.itemsize
        + packed['w_all'].size * packed['w_all'].dtype.itemsize
        + packed['wfc'].size * packed['wfc'].dtype.itemsize
        + (packed['b_all'].size + packed['bfc'].size + tmask.size) * 4
        + B_pad * C_pad * 4)

    out = pl.pallas_call(
        functools.partial(textcnn_kernel, M=M, taps=taps),
        # Logits stay f32 (C_pad=128 lane-dense unmasked stores); the output
        # is tiny, so bf16 writeback would save little and cost precision.
        out_shape=jax.ShapeDtypeStruct((B_pad, C_pad), jnp.float32),
        grid_spec=pltpu.PrefetchScalarGridSpec(
            num_scalar_prefetch=0,
            grid=grid,
            in_specs=[pl.BlockSpec((rows, D), lambda b: (b, 0)),
                      full_spec(packed['w_all']),
                      full_spec(packed['b_all']),
                      full_spec(tmask),
                      full_spec(packed['wfc']),
                      full_spec(packed['bfc'])],
            out_specs=pl.BlockSpec((Bt, C_pad), lambda b: (b, 0)),
        ),
        compiler_params=pltpu.CompilerParams(
            dimension_semantics=("parallel",),        # megacore on v7x
            vmem_limit_bytes=vmem_limit),
        cost_estimate=pl.CostEstimate(flops=flops, transcendentals=0,
                                      bytes_accessed=bytes_accessed),
    )(emb2d, packed['w_all'], packed['b_all'], tmask,
      packed['wfc'], packed['bfc'])

    return out[:B, :C]


# ---------------------------------------------------------------------------
# Pure-JAX reference and parameter init
# ---------------------------------------------------------------------------
def reference_forward(token_ids, params, compute_dtype=jnp.float32):
    """Pure-JAX mirror of the PyTorch forward (im2col style)."""
    emb = jnp.take(params['embedding'], token_ids, axis=0).astype(compute_dtype)
    B, M, D = emb.shape

    def conv_relu_pool(w, b):                 # w: (k, D, K) f32
        k, _, K = w.shape
        t_out = M - k + 1
        w2d = w.reshape(k * D, K).astype(compute_dtype)
        rows = []
        for t in range(t_out):
            win = emb[:, t:t + k, :].reshape(B, k * D)
            rows.append(jnp.dot(win, w2d, preferred_element_type=jnp.float32))
        conv = jnp.stack(rows, axis=1) + b.reshape(1, 1, K)
        return jnp.max(jnp.maximum(conv, 0.0), axis=1)

    cat = jnp.concatenate([conv_relu_pool(params['w3'], params['b3']),
                           conv_relu_pool(params['w4'], params['b4']),
                           conv_relu_pool(params['w5'], params['b5'])], axis=1)
    logits = jnp.dot(cat.astype(compute_dtype),
                     params['wfc'].astype(compute_dtype),
                     preferred_element_type=jnp.float32)
    return logits + params['bfc'].reshape(1, -1)


def init_params(key, vocab_size, emb_dim, kernel_num, class_num, pad_id):
    ks = jax.random.split(key, 10)
    scale = 0.1
    embedding = scale * jax.random.normal(ks[0], (vocab_size, emb_dim), jnp.float32)
    embedding = embedding.at[pad_id].set(0.0)                 # padding_idx row = 0

    def conv_w(k_key, ksize):
        # PyTorch Conv2d weight (K, 1, ksize, D) -> store as (ksize, D, K)
        w_pt = scale * jax.random.normal(k_key, (kernel_num, 1, ksize, emb_dim),
                                         jnp.float32)
        return jnp.transpose(w_pt[:, 0], (1, 2, 0))           # (ksize, D, K)

    return {
        'embedding': embedding,
        'w3': conv_w(ks[1], 3),
        'b3': scale * jax.random.normal(ks[2], (1, kernel_num), jnp.float32),
        'w4': conv_w(ks[3], 4),
        'b4': scale * jax.random.normal(ks[4], (1, kernel_num), jnp.float32),
        'w5': conv_w(ks[5], 5),
        'b5': scale * jax.random.normal(ks[6], (1, kernel_num), jnp.float32),
        # PyTorch Linear weight (C, 3K) -> store transpose (3K, C)
        'wfc': scale * jax.random.normal(ks[7], (3 * kernel_num, class_num), jnp.float32),
        'bfc': scale * jax.random.normal(ks[8], (1, class_num), jnp.float32),
    }


if __name__ == "__main__":
    # Small, module-consistent shapes; B=128 with the default block_b=64
    # exercises a 2-step batch grid (pipelined + megacore-parallel on v7x)
    # with 1024-row MXU tiles.
    B, M = 128, 16                # batch x padded sentence length
    vocab_size, emb_dim = 50, 32
    kernel_num, class_num = 8, 4
    pad_id = 0

    key = jax.random.PRNGKey(0)
    k_tok, k_params = jax.random.split(key)
    params = init_params(k_params, vocab_size, emb_dim, kernel_num, class_num, pad_id)

    token_ids = jax.random.randint(k_tok, (B, M), 0, vocab_size, dtype=jnp.int32)
    # len_per_sent is unused by the PyTorch forward (only in the signature).

    out = jax.block_until_ready(
        textcnn_forward(token_ids, params, block_b=64, compute_dtype=jnp.bfloat16))
    assert out.shape == (B, class_num)

    # Tight check vs a numerics-matched (bf16-input, f32-accum) reference,
    # loose check vs the full-f32 reference.
    ref_matched = reference_forward(token_ids, params, compute_dtype=jnp.bfloat16)
    ref_f32 = reference_forward(token_ids, params, compute_dtype=jnp.float32)
    assert jnp.allclose(out, ref_matched, atol=2e-3, rtol=2e-3)
    assert jnp.allclose(out, ref_f32, atol=2e-2, rtol=2e-2)

    print("KERNEL_OK")
</pallas_src>

<mosaic_0001>
module attributes {stable_mosaic.version = 11 : i64} {
  func.func @kern(%arg0: memref<8x128xf32, #tpu.memory_space<vmem>>, %arg1: memref<8x128xf32, #tpu.memory_space<vmem>>, %arg2: memref<8x128xf32, #tpu.memory_space<vmem>>, %arg3: memref<8x128xf32, #tpu.memory_space<vmem>>) attributes {dimension_semantics = [], scalar_prefetch = 0 : i64, scratch_operands = 0 : i64, tpu.core_type = #tpu.core_type<tc>} {
    %c0 = arith.constant 0 : index
    %c0_0 = arith.constant 0 : index
    %0 = vector.load %arg0[%c0, %c0_0] : memref<8x128xf32, #tpu.memory_space<vmem>>, vector<8x128xf32>
    %c1_i32 = arith.constant 1 : i32
    %1 = tpu.dynamic_rotate %0 by %c1_i32 dim 0 : vector<8x128xf32>, i32 -> vector<8x128xf32>
    %c0_1 = arith.constant 0 : index
    %c0_2 = arith.constant 0 : index
    %2 = vector.load %arg2[%c0_1, %c0_2] : memref<8x128xf32, #tpu.memory_space<vmem>>, vector<8x128xf32>
    tpu.vector_store %arg2[%c0_1, %c0_2], %1 {strides = array<i32>} : memref<8x128xf32, #tpu.memory_space<vmem>>, vector<8x128xf32>,
    %c0_3 = arith.constant 0 : index
    %c0_4 = arith.constant 0 : index
    %3 = vector.load %arg1[%c0_3, %c0_4] : memref<8x128xf32, #tpu.memory_space<vmem>>, vector<8x128xf32>
    %c1_i32_5 = arith.constant 1 : i32
    %4 = tpu.dynamic_rotate %3 by %c1_i32_5 dim 1 : vector<8x128xf32>, i32 -> vector<8x128xf32>
    %c0_6 = arith.constant 0 : index
    %c0_7 = arith.constant 0 : index
    %5 = vector.load %arg3[%c0_6, %c0_7] : memref<8x128xf32, #tpu.memory_space<vmem>>, vector<8x128xf32>
    tpu.vector_store %arg3[%c0_6, %c0_7], %4 {strides = array<i32>} : memref<8x128xf32, #tpu.memory_space<vmem>>, vector<8x128xf32>,
    return
  }
}

</mosaic_0001>

<llo_original>
// kernel: tpu_custom_call.1
$region0: #{tpu_custom_call.1}
  #allocation0 [shape = 'u32[]', space=smem, size = 0x4, offset = 0x4, fixed_abs, tag = 'smem constant byte address 0x4 - core index']
  #allocation1 [shape = 'u32[144,128]{1,0:T(1,128)}', space=vmem, size = 0x12000, scoped, tag = 'internal scratch']
  %s0 = inlined_call_operand.hbm [shape: f32[8,128], index: 0, kind: input, shape index: {}]
  %s1 = inlined_call_operand.hbm [shape: f32[8,128], index: 1, kind: input, shape index: {}]
  %s2 = inlined_call_operand.hbm [shape: f32[8,128], index: 2, kind: output, shape index: {0}]
  %s3 = inlined_call_operand.hbm [shape: f32[8,128], index: 3, kind: output, shape index: {1}]
  %4 = xla_tuple %s2, %s3
  %s5 = sld [smem:[#allocation0]]
  $region34: #{tpu_custom_call.1} parent=0
    _
  %s7 = ssub.s32 1, %s5
  %s8 = scalar_select 0, %s7, %s5
  $region1: #{tpu_custom_call.1} parent=0
    #allocation2 [shape = 'u8[4096]{0}', space=vmem, size = 0x1000, scoped, tag = 'input window, operand 0, single buffered']
    #allocation3 [shape = 's32[1]{0}', space=sflag, size = 0x4, scoped, tag = 'scoped memory for tpu_custom_call.1']
    #allocation4 [shape = 's32[1]{0}', space=sflag, size = 0x4, scoped, tag = 'scoped memory for tpu_custom_call.1']
    #allocation5 [shape = 'u8[4096]{0}', space=vmem, size = 0x1000, scoped, tag = 'input window, operand 1, single buffered']
    #allocation6 [shape = 's32[1]{0}', space=sflag, size = 0x4, scoped, tag = 'scoped memory for tpu_custom_call.1']
    #allocation7 [shape = 'u8[4096]{0}', space=vmem, size = 0x1000, scoped, tag = 'output window, operand 0, single buffered']
    #allocation8 [shape = 'u8[4096]{0}', space=vmem, size = 0x1000, scoped, tag = 'output window, operand 1, single buffered']
    #allocation9 [shape = 's32[1]{0}', space=sflag, size = 0x4, scoped, tag = 'scoped memory for tpu_custom_call.1']
    %9 = vsyncpa [#allocation3], 0
    %10 = vsyncpa [#allocation6], 0
    %11 = vsyncpa [#allocation4], 0
    %12 = vsyncpa [#allocation9], 0
    // Predicated region
    $region2: #{tpu_custom_call.1} parent=1 // pred_check
      _
    $region3: #{tpu_custom_call.1} parent=1 // pred_check_branch
      %14 = sbr.rel (0) target = $region5
    $region4: #{tpu_custom_call.1} parent=1 // pred_region
      %s16 = ssub.s32 128, 128
      %17 = vsyncadd [#allocation3], %s16
      %s19 = sshll.u32 [#allocation2], 4
      %s20 = int_to_ptr.vmem [resolvable:$true] %s19
      %22 = dma.hbm_to_vmem [thread:$0]  %s0, 128, %s20, [#allocation3]
    $region5: #{tpu_custom_call.1} parent=1 // pred_fallthru
      _
    // Predicated region
    $region6: #{tpu_custom_call.1} parent=1 // pred_check
      _
    $region7: #{tpu_custom_call.1} parent=1 // pred_check_branch
      %24 = sbr.rel (0) target = $region9
    $region8: #{tpu_custom_call.1} parent=1 // pred_region
      %s26 = ssub.s32 128, 128
      %27 = vsyncadd [#allocation6], %s26
      %s29 = sshll.u32 [#allocation5], 4
      %s30 = int_to_ptr.vmem [resolvable:$true] %s29
      %32 = dma.hbm_to_vmem [thread:$0]  %s1, 128, %s30, [#allocation6]
    $region9: #{tpu_custom_call.1} parent=1 // pred_fallthru
      _
    // Predicated region
    $region10: #{tpu_custom_call.1} parent=1 // pred_check
      _
    $region11: #{tpu_custom_call.1} parent=1 // pred_check_branch
      %34 = sbr.rel (0) target = $region13
    $region12: #{tpu_custom_call.1} parent=1 // pred_region
      %35 = dma.done [#allocation3], 128
    $region13: #{tpu_custom_call.1} parent=1 // pred_fallthru
      _
    // Predicated region
    $region14: #{tpu_custom_call.1} parent=1 // pred_check
      _
    $region15: #{tpu_custom_call.1} parent=1 // pred_check_branch
      %37 = sbr.rel (0) target = $region17
    $region16: #{tpu_custom_call.1} parent=1 // pred_region
      %38 = dma.done [#allocation6], 128
    $region17: #{tpu_custom_call.1} parent=1 // pred_fallthru
      _
    %v39 = vld [vmem:[#allocation2] sm:$0xff]
    %v40 = vrot.slane %v39, 7
    %41 = vst [vmem:[#allocation7] sm:$0xff] %v40
    %v42 = vld [vmem:[#allocation5] sm:$0xff]
    %43 = vrot.lane.b32.xlu0 %v42, 1
    %v44 = vpop.permute.xlu0 %43
    %45 = vst [vmem:[#allocation8] sm:$0xff] %v44
    // Predicated region
    $region18: #{tpu_custom_call.1} parent=1 // pred_check
      _
    $region19: #{tpu_custom_call.1} parent=1 // pred_check_branch
      %47 = sbr.rel (0) target = $region21
    $region20: #{tpu_custom_call.1} parent=1 // pred_region
      %s49 = ssub.s32 128, 128
      %50 = vsyncadd [#allocation4], %s49
      %s52 = sshll.u32 [#allocation7], 4
      %s53 = int_to_ptr.vmem [resolvable:$true] %s52
      %55 = dma.vmem_to_hbm [thread:$0]  %s53, 128, %s2, [#allocation4]
    $region21: #{tpu_custom_call.1} parent=1 // pred_fallthru
      _
    // Predicated region
    $region22: #{tpu_custom_call.1} parent=1 // pred_check
      _
    $region23: #{tpu_custom_call.1} parent=1 // pred_check_branch
      %57 = sbr.rel (0) target = $region25
    $region24: #{tpu_custom_call.1} parent=1 // pred_region
      %s59 = ssub.s32 128, 128
      %60 = vsyncadd [#allocation9], %s59
      %s62 = sshll.u32 [#allocation8], 4
      %s63 = int_to_ptr.vmem [resolvable:$true] %s62
      %65 = dma.vmem_to_hbm [thread:$0]  %s63, 128, %s3, [#allocation9]
    $region25: #{tpu_custom_call.1} parent=1 // pred_fallthru
      _
    // Predicated region
    $region26: #{tpu_custom_call.1} parent=1 // pred_check
      _
    $region27: #{tpu_custom_call.1} parent=1 // pred_check_branch
      %67 = sbr.rel (0) target = $region29
    $region28: #{tpu_custom_call.1} parent=1 // pred_region
      %68 = dma.done [#allocation4], 128
    $region29: #{tpu_custom_call.1} parent=1 // pred_fallthru
      _
    // Predicated region
    $region30: #{tpu_custom_call.1} parent=1 // pred_check
      _
    $region31: #{tpu_custom_call.1} parent=1 // pred_check_branch
      %70 = sbr.rel (0) target = $region33
    $region32: #{tpu_custom_call.1} parent=1 // pred_region
      %71 = dma.done [#allocation9], 128
    $region33: #{tpu_custom_call.1} parent=1 // pred_fallthru
      _
    %72 = vsyncpa [#allocation3], 1
    %73 = vsyncpa [#allocation6], 1
    %74 = vsyncpa [#allocation4], 1
    %75 = vsyncpa [#allocation9], 1

</llo_original>
